<compile_context>
chip_gen: v7x
topology: tpu7x:2x2x1
jax: 0.10.0
libtpu: 0.0.40
codegen_flags: <defaults>
</compile_context>

<pallas_src>
import jax
import jax.numpy as jnp
from jax.experimental import pallas as pl
from jax.experimental.pallas import tpu as pltpu

LANES = 128
SUBLANES = 8
HIDDEN = 10


def mlp_kernel(x_ref, w1_ref, b1_ref, w2_ref, b2_ref, o_ref):
    """Elementwise MLP on a lane-dense (TM, 128) f32 tile.

    x_ref/o_ref: (TM, 128) f32 VMEM tiles (batch spread over sublanes+lanes).
    w1/b1/w2: (10,) f32 in SMEM; b2: (1,) f32 in SMEM.
    Pure VPU work (FMA + max), no MXU push/pop, no cross-lane (XLU) ops,
    f32 accumulation in a single vreg, one unmasked store per tile.
    """
    x = x_ref[...]
    acc = jnp.zeros_like(x)
    for j in range(HIDDEN):  # static unroll: 10 scalar-broadcast FMA + relu
        acc = acc + jnp.maximum(x * w1_ref[j] + b1_ref[j], 0.0) * w2_ref[j]
    o_ref[...] = acc + b2_ref[0]


def my_module_forward(x, w1, b1, w2, b2, *, tm_max=512):
    """x: (N, 1) f32; w1: (1, 10); b1: (1, 10); w2: (10, 1); b2: (1, 1).

    Returns (N, 1) f32, identical semantics to the PyTorch module's forward.
    """
    n = x.shape[0]
    xf = x.reshape(-1).astype(jnp.float32)

    # Lane-dense layout: batch -> (rows, 128); rows padded to a multiple of the
    # tile height TM (itself a multiple of 8 to satisfy the (8,128) constraint).
    rows_needed = pl.cdiv(n, LANES)
    tm = min(tm_max,
             max(SUBLANES, ((rows_needed + SUBLANES - 1) // SUBLANES) * SUBLANES))
    block_elems = tm * LANES
    n_pad = pl.cdiv(n, block_elems) * block_elems
    xp = jnp.pad(xf, (0, n_pad - n)).reshape(n_pad // LANES, LANES)
    grid = (n_pad // block_elems,)

    # Flatten the tiny parameters; they ride in SMEM as scalars.
    w1f = w1.reshape(-1).astype(jnp.float32)   # (10,)
    b1f = b1.reshape(-1).astype(jnp.float32)   # (10,)
    w2f = w2.reshape(-1).astype(jnp.float32)   # (10,)
    b2f = b2.reshape(-1).astype(jnp.float32)   # (1,)

    smem = pl.BlockSpec(memory_space=pltpu.MemorySpace.SMEM)

    out2d = pl.pallas_call(
        mlp_kernel,
        out_shape=jax.ShapeDtypeStruct((n_pad // LANES, LANES), jnp.float32),
        grid_spec=pltpu.PrefetchScalarGridSpec(
            num_scalar_prefetch=0,
            grid=grid,
            in_specs=[
                pl.BlockSpec((tm, LANES), lambda i: (i, 0)),  # x tiles
                smem, smem, smem, smem,                       # w1, b1, w2, b2
            ],
            out_specs=pl.BlockSpec((tm, LANES), lambda i: (i, 0)),
        ),
        compiler_params=pltpu.CompilerParams(
            dimension_semantics=("parallel",),   # independent batch tiles
        ),
        cost_estimate=pl.CostEstimate(
            flops=5 * HIDDEN * n_pad + n_pad,    # 10x (mul+add+max+mul+add) + b2
            transcendentals=0,
            bytes_accessed=8 * n_pad,            # 4B read + 4B write per element
        ),
    )(xp, w1f, b1f, w2f, b2f)

    # Padded tail elements compute relu(b1)*w2 + b2 (harmless); slice them off.
    return out2d.reshape(-1)[:n].reshape(n, 1)


def init_params(key):
    """Deterministic init mimicking nn.Linear's U(-1/sqrt(fan_in), 1/sqrt(fan_in))."""
    k1, k2, k3, k4 = jax.random.split(key, 4)
    bound1 = 1.0  # 1/sqrt(1)
    w1 = jax.random.uniform(k1, (1, 10), jnp.float32, -bound1, bound1)
    b1 = jax.random.uniform(k2, (1, 10), jnp.float32, -bound1, bound1)
    bound2 = 1.0 / jnp.sqrt(10.0)
    w2 = jax.random.uniform(k3, (10, 1), jnp.float32, -bound2, bound2)
    b2 = jax.random.uniform(k4, (1, 1), jnp.float32, -bound2, bound2)
    return w1, b1, w2, b2


def _ref(x, w1, b1, w2, b2):
    return jnp.maximum(x @ w1 + b1, 0.0) @ w2 + b2


if __name__ == "__main__":
    key = jax.random.PRNGKey(0)
    w1, b1, w2, b2 = init_params(key)

    # Same input as the PyTorch script: x = [[1.],[2.],[3.],[4.],[5.]]
    x_small = jnp.array([[1.0], [2.0], [3.0], [4.0], [5.0]], dtype=jnp.float32)
    out_small = jax.block_until_ready(my_module_forward(x_small, w1, b1, w2, b2))
    assert out_small.shape == (5, 1)
    assert jnp.allclose(out_small, _ref(x_small, w1, b1, w2, b2), atol=1e-5)

    # Larger batch: exercises padding and a multi-block, pipelined parallel grid.
    x_big = jax.random.normal(jax.random.PRNGKey(1), (3000, 1), jnp.float32)
    out_big = jax.block_until_ready(
        my_module_forward(x_big, w1, b1, w2, b2, tm_max=8))
    assert out_big.shape == (3000, 1)
    assert jnp.allclose(out_big, _ref(x_big, w1, b1, w2, b2), atol=1e-5)

    print("KERNEL_OK")
</pallas_src>

<mosaic_0001>
module attributes {stable_mosaic.version = 11 : i64} {
  func.func @mlp_kernel(%arg0: i32, %arg1: memref<8x128xf32, #tpu.memory_space<vmem>>, %arg2: memref<10xf32, #tpu.memory_space<smem>>, %arg3: memref<10xf32, #tpu.memory_space<smem>>, %arg4: memref<10xf32, #tpu.memory_space<smem>>, %arg5: memref<1xf32, #tpu.memory_space<smem>>, %arg6: memref<8x128xf32, #tpu.memory_space<vmem>>) attributes {dimension_semantics = [#tpu.dimension_semantics<parallel>], iteration_bounds = array<i64: 1>, scalar_prefetch = 0 : i64, scratch_operands = 0 : i64, tpu.core_type = #tpu.core_type<tc>, window_params = [{transform_indices = @transform_0, window_bounds = array<i64: 8, 128>}, {transform_indices = @transform_1, window_bounds = array<i64: 10>}, {transform_indices = @transform_2, window_bounds = array<i64: 10>}, {transform_indices = @transform_3, window_bounds = array<i64: 10>}, {transform_indices = @transform_4, window_bounds = array<i64: 1>}, {transform_indices = @transform_5, window_bounds = array<i64: 8, 128>}]} {
    %c0 = arith.constant 0 : index
    %c0_0 = arith.constant 0 : index
    %0 = vector.load %arg1[%c0, %c0_0] : memref<8x128xf32, #tpu.memory_space<vmem>>, vector<8x128xf32>
    %cst = arith.constant 0.000000e+00 : f32
    %1 = vector.broadcast %cst : f32 to vector<8x128xf32>
    %c0_1 = arith.constant 0 : index
    %2 = memref.load %arg2[%c0_1] : memref<10xf32, #tpu.memory_space<smem>>
    %3 = vector.broadcast %2 : f32 to vector<8x128xf32>
    %4 = arith.mulf %0, %3 : vector<8x128xf32>
    %c0_2 = arith.constant 0 : index
    %5 = memref.load %arg3[%c0_2] : memref<10xf32, #tpu.memory_space<smem>>
    %6 = vector.broadcast %5 : f32 to vector<8x128xf32>
    %7 = arith.addf %4, %6 : vector<8x128xf32>
    %cst_3 = arith.constant 0.000000e+00 : f32
    %8 = vector.broadcast %cst_3 : f32 to vector<8x128xf32>
    %9 = arith.maximumf %7, %8 : vector<8x128xf32>
    %c0_4 = arith.constant 0 : index
    %10 = memref.load %arg4[%c0_4] : memref<10xf32, #tpu.memory_space<smem>>
    %11 = vector.broadcast %10 : f32 to vector<8x128xf32>
    %12 = arith.mulf %9, %11 : vector<8x128xf32>
    %13 = arith.addf %1, %12 : vector<8x128xf32>
    %c1 = arith.constant 1 : index
    %14 = memref.load %arg2[%c1] : memref<10xf32, #tpu.memory_space<smem>>
    %15 = vector.broadcast %14 : f32 to vector<8x128xf32>
    %16 = arith.mulf %0, %15 : vector<8x128xf32>
    %c1_5 = arith.constant 1 : index
    %17 = memref.load %arg3[%c1_5] : memref<10xf32, #tpu.memory_space<smem>>
    %18 = vector.broadcast %17 : f32 to vector<8x128xf32>
    %19 = arith.addf %16, %18 : vector<8x128xf32>
    %cst_6 = arith.constant 0.000000e+00 : f32
    %20 = vector.broadcast %cst_6 : f32 to vector<8x128xf32>
    %21 = arith.maximumf %19, %20 : vector<8x128xf32>
    %c1_7 = arith.constant 1 : index
    %22 = memref.load %arg4[%c1_7] : memref<10xf32, #tpu.memory_space<smem>>
    %23 = vector.broadcast %22 : f32 to vector<8x128xf32>
    %24 = arith.mulf %21, %23 : vector<8x128xf32>
    %25 = arith.addf %13, %24 : vector<8x128xf32>
    %c2 = arith.constant 2 : index
    %26 = memref.load %arg2[%c2] : memref<10xf32, #tpu.memory_space<smem>>
    %27 = vector.broadcast %26 : f32 to vector<8x128xf32>
    %28 = arith.mulf %0, %27 : vector<8x128xf32>
    %c2_8 = arith.constant 2 : index
    %29 = memref.load %arg3[%c2_8] : memref<10xf32, #tpu.memory_space<smem>>
    %30 = vector.broadcast %29 : f32 to vector<8x128xf32>
    %31 = arith.addf %28, %30 : vector<8x128xf32>
    %cst_9 = arith.constant 0.000000e+00 : f32
    %32 = vector.broadcast %cst_9 : f32 to vector<8x128xf32>
    %33 = arith.maximumf %31, %32 : vector<8x128xf32>
    %c2_10 = arith.constant 2 : index
    %34 = memref.load %arg4[%c2_10] : memref<10xf32, #tpu.memory_space<smem>>
    %35 = vector.broadcast %34 : f32 to vector<8x128xf32>
    %36 = arith.mulf %33, %35 : vector<8x128xf32>
    %37 = arith.addf %25, %36 : vector<8x128xf32>
    %c3 = arith.constant 3 : index
    %38 = memref.load %arg2[%c3] : memref<10xf32, #tpu.memory_space<smem>>
    %39 = vector.broadcast %38 : f32 to vector<8x128xf32>
    %40 = arith.mulf %0, %39 : vector<8x128xf32>
    %c3_11 = arith.constant 3 : index
    %41 = memref.load %arg3[%c3_11] : memref<10xf32, #tpu.memory_space<smem>>
    %42 = vector.broadcast %41 : f32 to vector<8x128xf32>
    %43 = arith.addf %40, %42 : vector<8x128xf32>
    %cst_12 = arith.constant 0.000000e+00 : f32
    %44 = vector.broadcast %cst_12 : f32 to vector<8x128xf32>
    %45 = arith.maximumf %43, %44 : vector<8x128xf32>
    %c3_13 = arith.constant 3 : index
    %46 = memref.load %arg4[%c3_13] : memref<10xf32, #tpu.memory_space<smem>>
    %47 = vector.broadcast %46 : f32 to vector<8x128xf32>
    %48 = arith.mulf %45, %47 : vector<8x128xf32>
    %49 = arith.addf %37, %48 : vector<8x128xf32>
    %c4 = arith.constant 4 : index
    %50 = memref.load %arg2[%c4] : memref<10xf32, #tpu.memory_space<smem>>
    %51 = vector.broadcast %50 : f32 to vector<8x128xf32>
    %52 = arith.mulf %0, %51 : vector<8x128xf32>
    %c4_14 = arith.constant 4 : index
    %53 = memref.load %arg3[%c4_14] : memref<10xf32, #tpu.memory_space<smem>>
    %54 = vector.broadcast %53 : f32 to vector<8x128xf32>
    %55 = arith.addf %52, %54 : vector<8x128xf32>
    %cst_15 = arith.constant 0.000000e+00 : f32
    %56 = vector.broadcast %cst_15 : f32 to vector<8x128xf32>
    %57 = arith.maximumf %55, %56 : vector<8x128xf32>
    %c4_16 = arith.constant 4 : index
    %58 = memref.load %arg4[%c4_16] : memref<10xf32, #tpu.memory_space<smem>>
    %59 = vector.broadcast %58 : f32 to vector<8x128xf32>
    %60 = arith.mulf %57, %59 : vector<8x128xf32>
    %61 = arith.addf %49, %60 : vector<8x128xf32>
    %c5 = arith.constant 5 : index
    %62 = memref.load %arg2[%c5] : memref<10xf32, #tpu.memory_space<smem>>
    %63 = vector.broadcast %62 : f32 to vector<8x128xf32>
    %64 = arith.mulf %0, %63 : vector<8x128xf32>
    %c5_17 = arith.constant 5 : index
    %65 = memref.load %arg3[%c5_17] : memref<10xf32, #tpu.memory_space<smem>>
    %66 = vector.broadcast %65 : f32 to vector<8x128xf32>
    %67 = arith.addf %64, %66 : vector<8x128xf32>
    %cst_18 = arith.constant 0.000000e+00 : f32
    %68 = vector.broadcast %cst_18 : f32 to vector<8x128xf32>
    %69 = arith.maximumf %67, %68 : vector<8x128xf32>
    %c5_19 = arith.constant 5 : index
    %70 = memref.load %arg4[%c5_19] : memref<10xf32, #tpu.memory_space<smem>>
    %71 = vector.broadcast %70 : f32 to vector<8x128xf32>
    %72 = arith.mulf %69, %71 : vector<8x128xf32>
    %73 = arith.addf %61, %72 : vector<8x128xf32>
    %c6 = arith.constant 6 : index
    %74 = memref.load %arg2[%c6] : memref<10xf32, #tpu.memory_space<smem>>
    %75 = vector.broadcast %74 : f32 to vector<8x128xf32>
    %76 = arith.mulf %0, %75 : vector<8x128xf32>
    %c6_20 = arith.constant 6 : index
    %77 = memref.load %arg3[%c6_20] : memref<10xf32, #tpu.memory_space<smem>>
    %78 = vector.broadcast %77 : f32 to vector<8x128xf32>
    %79 = arith.addf %76, %78 : vector<8x128xf32>
    %cst_21 = arith.constant 0.000000e+00 : f32
    %80 = vector.broadcast %cst_21 : f32 to vector<8x128xf32>
    %81 = arith.maximumf %79, %80 : vector<8x128xf32>
    %c6_22 = arith.constant 6 : index
    %82 = memref.load %arg4[%c6_22] : memref<10xf32, #tpu.memory_space<smem>>
    %83 = vector.broadcast %82 : f32 to vector<8x128xf32>
    %84 = arith.mulf %81, %83 : vector<8x128xf32>
    %85 = arith.addf %73, %84 : vector<8x128xf32>
    %c7 = arith.constant 7 : index
    %86 = memref.load %arg2[%c7] : memref<10xf32, #tpu.memory_space<smem>>
    %87 = vector.broadcast %86 : f32 to vector<8x128xf32>
    %88 = arith.mulf %0, %87 : vector<8x128xf32>
    %c7_23 = arith.constant 7 : index
    %89 = memref.load %arg3[%c7_23] : memref<10xf32, #tpu.memory_space<smem>>
    %90 = vector.broadcast %89 : f32 to vector<8x128xf32>
    %91 = arith.addf %88, %90 : vector<8x128xf32>
    %cst_24 = arith.constant 0.000000e+00 : f32
    %92 = vector.broadcast %cst_24 : f32 to vector<8x128xf32>
    %93 = arith.maximumf %91, %92 : vector<8x128xf32>
    %c7_25 = arith.constant 7 : index
    %94 = memref.load %arg4[%c7_25] : memref<10xf32, #tpu.memory_space<smem>>
    %95 = vector.broadcast %94 : f32 to vector<8x128xf32>
    %96 = arith.mulf %93, %95 : vector<8x128xf32>
    %97 = arith.addf %85, %96 : vector<8x128xf32>
    %c8 = arith.constant 8 : index
    %98 = memref.load %arg2[%c8] : memref<10xf32, #tpu.memory_space<smem>>
    %99 = vector.broadcast %98 : f32 to vector<8x128xf32>
    %100 = arith.mulf %0, %99 : vector<8x128xf32>
    %c8_26 = arith.constant 8 : index
    %101 = memref.load %arg3[%c8_26] : memref<10xf32, #tpu.memory_space<smem>>
    %102 = vector.broadcast %101 : f32 to vector<8x128xf32>
    %103 = arith.addf %100, %102 : vector<8x128xf32>
    %cst_27 = arith.constant 0.000000e+00 : f32
    %104 = vector.broadcast %cst_27 : f32 to vector<8x128xf32>
    %105 = arith.maximumf %103, %104 : vector<8x128xf32>
    %c8_28 = arith.constant 8 : index
    %106 = memref.load %arg4[%c8_28] : memref<10xf32, #tpu.memory_space<smem>>
    %107 = vector.broadcast %106 : f32 to vector<8x128xf32>
    %108 = arith.mulf %105, %107 : vector<8x128xf32>
    %109 = arith.addf %97, %108 : vector<8x128xf32>
    %c9 = arith.constant 9 : index
    %110 = memref.load %arg2[%c9] : memref<10xf32, #tpu.memory_space<smem>>
    %111 = vector.broadcast %110 : f32 to vector<8x128xf32>
    %112 = arith.mulf %0, %111 : vector<8x128xf32>
    %c9_29 = arith.constant 9 : index
    %113 = memref.load %arg3[%c9_29] : memref<10xf32, #tpu.memory_space<smem>>
    %114 = vector.broadcast %113 : f32 to vector<8x128xf32>
    %115 = arith.addf %112, %114 : vector<8x128xf32>
    %cst_30 = arith.constant 0.000000e+00 : f32
    %116 = vector.broadcast %cst_30 : f32 to vector<8x128xf32>
    %117 = arith.maximumf %115, %116 : vector<8x128xf32>
    %c9_31 = arith.constant 9 : index
    %118 = memref.load %arg4[%c9_31] : memref<10xf32, #tpu.memory_space<smem>>
    %119 = vector.broadcast %118 : f32 to vector<8x128xf32>
    %120 = arith.mulf %117, %119 : vector<8x128xf32>
    %121 = arith.addf %109, %120 : vector<8x128xf32>
    %c0_32 = arith.constant 0 : index
    %122 = memref.load %arg5[%c0_32] : memref<1xf32, #tpu.memory_space<smem>>
    %123 = vector.broadcast %122 : f32 to vector<8x128xf32>
    %124 = arith.addf %121, %123 : vector<8x128xf32>
    %c0_33 = arith.constant 0 : index
    %c0_34 = arith.constant 0 : index
    %125 = vector.load %arg6[%c0_33, %c0_34] : memref<8x128xf32, #tpu.memory_space<vmem>>, vector<8x128xf32>
    tpu.vector_store %arg6[%c0_33, %c0_34], %124 {strides = array<i32>} : memref<8x128xf32, #tpu.memory_space<vmem>>, vector<8x128xf32>,
    return
  }
  func.func @transform_0(%arg0: i32) -> (i32, i32) {
    %c0_i32 = arith.constant 0 : i32
    %c0_i32_0 = arith.constant 0 : i32
    return %arg0, %c0_i32 : i32, i32
  }
  func.func @transform_1(%arg0: i32) -> i32 {
    %c0_i32 = arith.constant 0 : i32
    %c0_i32_0 = arith.constant 0 : i32
    return %c0_i32 : i32
  }
  func.func @transform_2(%arg0: i32) -> i32 {
    %c0_i32 = arith.constant 0 : i32
    %c0_i32_0 = arith.constant 0 : i32
    return %c0_i32 : i32
  }
  func.func @transform_3(%arg0: i32) -> i32 {
    %c0_i32 = arith.constant 0 : i32
    %c0_i32_0 = arith.constant 0 : i32
    return %c0_i32 : i32
  }
  func.func @transform_4(%arg0: i32) -> i32 {
    %c0_i32 = arith.constant 0 : i32
    %c0_i32_0 = arith.constant 0 : i32
    return %c0_i32 : i32
  }
  func.func @transform_5(%arg0: i32) -> (i32, i32) {
    %c0_i32 = arith.constant 0 : i32
    %c0_i32_0 = arith.constant 0 : i32
    return %arg0, %c0_i32 : i32, i32
  }
}

</mosaic_0001>

<llo_original>
// kernel: tpu_custom_call.1
$region0: #{tpu_custom_call.1}
  #allocation0 [shape = 'u32[]', space=smem, size = 0x4, offset = 0x4, fixed_abs, tag = 'smem constant byte address 0x4 - core index']
  #allocation1 [shape = 'u32[144,128]{1,0:T(1,128)}', space=vmem, size = 0x12000, scoped, tag = 'internal scratch']
  #allocation2 [shape = 'f32[1]{0:T(128)S(6)}', space=smem, size = 0x200, scoped, tag = 'scoped memory for tpu_custom_call.1']
  %s0 = inlined_call_operand.hbm [shape: f32[8,128], index: 0, kind: input, shape index: {}]
  %s1 = inlined_call_operand.vmem [shape: f32[10], index: 1, kind: input, shape index: {}]
  %s2 = inlined_call_operand.vmem [shape: f32[10], index: 2, kind: input, shape index: {}]
  %s3 = inlined_call_operand.vmem [shape: f32[10], index: 3, kind: input, shape index: {}]
  %s4 = inlined_call_operand.<no memory space> [shape: f32[1], index: 4, kind: input, shape index: {}]
  %s5 = inlined_call_operand.hbm [shape: f32[8,128], index: 5, kind: output, shape index: {}]
  %s6 = sld [smem:[#allocation0]]
  $region46: #{tpu_custom_call.1} parent=0
    _
  %s8 = ssub.s32 1, %s6
  %s9 = scalar_select 0, %s8, %s6
  %10 = sst [smem:[#allocation2]] %s4
  $region1: #{tpu_custom_call.1} parent=0
    #allocation3 [shape = 'u8[4096]{0}', space=vmem, size = 0x1000, scoped, tag = 'input window, operand 0, single buffered']
    #allocation4 [shape = 's32[1]{0}', space=sflag, size = 0x4, scoped, tag = 'scoped memory for tpu_custom_call.1']
    #allocation5 [shape = 's32[1]{0}', space=sflag, size = 0x4, scoped, tag = 'scoped memory for tpu_custom_call.1']
    #allocation6 [shape = 's32[1]{0}', space=sflag, size = 0x4, scoped, tag = 'scoped memory for tpu_custom_call.1']
    #allocation7 [shape = 'u8[512]{0}', space=smem, size = 0x200, scoped, tag = 'input window, operand 1, single buffered']
    #allocation8 [shape = 'u8[512]{0}', space=smem, size = 0x200, scoped, tag = 'input window, operand 2, single buffered']
    #allocation9 [shape = 's32[1]{0}', space=sflag, size = 0x4, scoped, tag = 'scoped memory for tpu_custom_call.1']
    #allocation10 [shape = 'u8[512]{0}', space=smem, size = 0x200, scoped, tag = 'input window, operand 3, single buffered']
    #allocation11 [shape = 'u8[4096]{0}', space=vmem, size = 0x1000, scoped, tag = 'output window, operand 0, single buffered']
    %11 = vsyncpa [#allocation4], 0
    %12 = vsyncpa [#allocation6], 0
    %13 = vsyncpa [#allocation9], 0
    %14 = vsyncpa [#allocation5], 0
    // Predicated region
    $region2: #{tpu_custom_call.1} parent=1 // pred_check
      _
    $region3: #{tpu_custom_call.1} parent=1 // pred_check_branch
      %16 = sbr.rel (0) target = $region5
    $region4: #{tpu_custom_call.1} parent=1 // pred_region
      %s18 = ssub.s32 128, 128
      %19 = vsyncadd [#allocation4], %s18
      %s21 = sshll.u32 [#allocation3], 4
      %s22 = int_to_ptr.vmem [resolvable:$true] %s21
      %24 = dma.hbm_to_vmem [thread:$0]  %s0, 128, %s22, [#allocation4]
    $region5: #{tpu_custom_call.1} parent=1 // pred_fallthru
      _
    // Predicated region
    $region6: #{tpu_custom_call.1} parent=1 // pred_check
      _
    $region7: #{tpu_custom_call.1} parent=1 // pred_check_branch
      %26 = sbr.rel (0) target = $region9
    $region8: #{tpu_custom_call.1} parent=1 // pred_region
      %s28 = ssub.s32 16, 16
      %29 = vsyncadd [#allocation6], %s28
      %s31 = sshll.u32 %s1, 4
      %s32 = int_to_ptr.vmem [resolvable:$true] %s31
      %34 = dma.vmem_to_smem %s32, 16, [#allocation7], [#allocation6]
    $region9: #{tpu_custom_call.1} parent=1 // pred_fallthru
      _
    // Predicated region
    $region10: #{tpu_custom_call.1} parent=1 // pred_check
      _
    $region11: #{tpu_custom_call.1} parent=1 // pred_check_branch
      %36 = sbr.rel (0) target = $region13
    $region12: #{tpu_custom_call.1} parent=1 // pred_region
      %s38 = ssub.s32 16, 16
      %39 = vsyncadd [#allocation9], %s38
      %s41 = sshll.u32 %s2, 4
      %s42 = int_to_ptr.vmem [resolvable:$true] %s41
      %44 = dma.vmem_to_smem %s42, 16, [#allocation8], [#allocation9]
    $region13: #{tpu_custom_call.1} parent=1 // pred_fallthru
      _
    // Predicated region
    $region14: #{tpu_custom_call.1} parent=1 // pred_check
      _
    $region15: #{tpu_custom_call.1} parent=1 // pred_check_branch
      %46 = sbr.rel (0) target = $region17
    $region16: #{tpu_custom_call.1} parent=1 // pred_region
      %s48 = ssub.s32 16, 16
      %49 = vsyncadd [#allocation9], %s48
      %s51 = sshll.u32 %s3, 4
      %s52 = int_to_ptr.vmem [resolvable:$true] %s51
      %54 = dma.vmem_to_smem %s52, 16, [#allocation10], [#allocation9]
    $region17: #{tpu_custom_call.1} parent=1 // pred_fallthru
      _
    // Predicated region
    $region18: #{tpu_custom_call.1} parent=1 // pred_check
      _
    $region19: #{tpu_custom_call.1} parent=1 // pred_check_branch
      %56 = sbr.rel (0) target = $region21
    $region20: #{tpu_custom_call.1} parent=1 // pred_region
      _
    $region21: #{tpu_custom_call.1} parent=1 // pred_fallthru
      _
    // Predicated region
    $region22: #{tpu_custom_call.1} parent=1 // pred_check
      _
    $region23: #{tpu_custom_call.1} parent=1 // pred_check_branch
      %58 = sbr.rel (0) target = $region25
    $region24: #{tpu_custom_call.1} parent=1 // pred_region
      %59 = dma.done [#allocation4], 128
    $region25: #{tpu_custom_call.1} parent=1 // pred_fallthru
      _
    // Predicated region
    $region26: #{tpu_custom_call.1} parent=1 // pred_check
      _
    $region27: #{tpu_custom_call.1} parent=1 // pred_check_branch
      %61 = sbr.rel (0) target = $region29
    $region28: #{tpu_custom_call.1} parent=1 // pred_region
      %62 = dma.done [#allocation6], 16
    $region29: #{tpu_custom_call.1} parent=1 // pred_fallthru
      _
    // Predicated region
    $region30: #{tpu_custom_call.1} parent=1 // pred_check
      _
    $region31: #{tpu_custom_call.1} parent=1 // pred_check_branch
      %64 = sbr.rel (0) target = $region33
    $region32: #{tpu_custom_call.1} parent=1 // pred_region
      %65 = dma.done [#allocation9], 16
    $region33: #{tpu_custom_call.1} parent=1 // pred_fallthru
      _
    // Predicated region
    $region34: #{tpu_custom_call.1} parent=1 // pred_check
      _
    $region35: #{tpu_custom_call.1} parent=1 // pred_check_branch
      %67 = sbr.rel (0) target = $region37
    $region36: #{tpu_custom_call.1} parent=1 // pred_region
      %68 = dma.done [#allocation9], 16
    $region37: #{tpu_custom_call.1} parent=1 // pred_fallthru
      _
    %69 = sfence
    %v70 = vld [vmem:[#allocation3] sm:$0xff]
    %s71 = sld [smem:[#allocation7]]
    %v72 = vstv %s71
    %v73 = vmul.f32 %v70, %v72
    %s74 = sld [smem:[#allocation8]]
    %v75 = vstv %s74
    %v76 = vadd.f32 %v73, %v75
    %v77 = vmax.f32 %v76, 0.0
    %s78 = sld [smem:[#allocation10]]
    %v79 = vstv %s78
    %v80 = vmul.f32 %v77, %v79
    %v81 = vadd.f32 %v80, 0.0
    %s82 = sld [smem:[#allocation7 + $0x1]]
    %v83 = vstv %s82
    %v84 = vmul.f32 %v70, %v83
    %s85 = sld [smem:[#allocation8 + $0x1]]
    %v86 = vstv %s85
    %v87 = vadd.f32 %v84, %v86
    %v88 = vmax.f32 %v87, 0.0
    %s89 = sld [smem:[#allocation10 + $0x1]]
    %v90 = vstv %s89
    %v91 = vmul.f32 %v88, %v90
    %v92 = vadd.f32 %v81, %v91
    %s93 = sld [smem:[#allocation7 + $0x2]]
    %v94 = vstv %s93
    %v95 = vmul.f32 %v70, %v94
    %s96 = sld [smem:[#allocation8 + $0x2]]
    %v97 = vstv %s96
    %v98 = vadd.f32 %v95, %v97
    %v99 = vmax.f32 %v98, 0.0
    %s100 = sld [smem:[#allocation10 + $0x2]]
    %v101 = vstv %s100
    %v102 = vmul.f32 %v99, %v101
    %v103 = vadd.f32 %v92, %v102
    %s104 = sld [smem:[#allocation7 + $0x3]]
    %v105 = vstv %s104
    %v106 = vmul.f32 %v70, %v105
    %s107 = sld [smem:[#allocation8 + $0x3]]
    %v108 = vstv %s107
    %v109 = vadd.f32 %v106, %v108
    %v110 = vmax.f32 %v109, 0.0
    %s111 = sld [smem:[#allocation10 + $0x3]]
    %v112 = vstv %s111
    %v113 = vmul.f32 %v110, %v112
    %v114 = vadd.f32 %v103, %v113
    %s115 = sld [smem:[#allocation7 + $0x4]]
    %v116 = vstv %s115
    %v117 = vmul.f32 %v70, %v116
    %s118 = sld [smem:[#allocation8 + $0x4]]
    %v119 = vstv %s118
    %v120 = vadd.f32 %v117, %v119
    %v121 = vmax.f32 %v120, 0.0
    %s122 = sld [smem:[#allocation10 + $0x4]]
    %v123 = vstv %s122
    %v124 = vmul.f32 %v121, %v123
    %v125 = vadd.f32 %v114, %v124
    %s126 = sld [smem:[#allocation7 + $0x5]]
    %v127 = vstv %s126
    %v128 = vmul.f32 %v70, %v127
    %s129 = sld [smem:[#allocation8 + $0x5]]
    %v130 = vstv %s129
    %v131 = vadd.f32 %v128, %v130
    %v132 = vmax.f32 %v131, 0.0
    %s133 = sld [smem:[#allocation10 + $0x5]]
    %v134 = vstv %s133
    %v135 = vmul.f32 %v132, %v134
    %v136 = vadd.f32 %v125, %v135
    %s137 = sld [smem:[#allocation7 + $0x6]]
    %v138 = vstv %s137
    %v139 = vmul.f32 %v70, %v138
    %s140 = sld [smem:[#allocation8 + $0x6]]
    %v141 = vstv %s140
    %v142 = vadd.f32 %v139, %v141
    %v143 = vmax.f32 %v142, 0.0
    %s144 = sld [smem:[#allocation10 + $0x6]]
    %v145 = vstv %s144
    %v146 = vmul.f32 %v143, %v145
    %v147 = vadd.f32 %v136, %v146
    %s148 = sld [smem:[#allocation7 + $0x7]]
    %v149 = vstv %s148
    %v150 = vmul.f32 %v70, %v149
    %s151 = sld [smem:[#allocation8 + $0x7]]
    %v152 = vstv %s151
    %v153 = vadd.f32 %v150, %v152
    %v154 = vmax.f32 %v153, 0.0
    %s155 = sld [smem:[#allocation10 + $0x7]]
    %v156 = vstv %s155
    %v157 = vmul.f32 %v154, %v156
    %v158 = vadd.f32 %v147, %v157
    %s159 = sld [smem:[#allocation7 + $0x8]]
    %v160 = vstv %s159
    %v161 = vmul.f32 %v70, %v160
    %s162 = sld [smem:[#allocation8 + $0x8]]
    %v163 = vstv %s162
    %v164 = vadd.f32 %v161, %v163
    %v165 = vmax.f32 %v164, 0.0
    %s166 = sld [smem:[#allocation10 + $0x8]]
    %v167 = vstv %s166
    %v168 = vmul.f32 %v165, %v167
    %v169 = vadd.f32 %v158, %v168
    %s170 = sld [smem:[#allocation7 + $0x9]]
    %v171 = vstv %s170
    %v172 = vmul.f32 %v70, %v171
    %s173 = sld [smem:[#allocation8 + $0x9]]
    %v174 = vstv %s173
    %v175 = vadd.f32 %v172, %v174
    %v176 = vmax.f32 %v175, 0.0
    %s177 = sld [smem:[#allocation10 + $0x9]]
    %v178 = vstv %s177
    %v179 = vmul.f32 %v176, %v178
    %v180 = vadd.f32 %v169, %v179
    %s181 = sld [smem:[#allocation2]]
    %v182 = vstv %s181
    %v183 = vadd.f32 %v180, %v182
    %184 = vst [vmem:[#allocation11] sm:$0xff] %v183
    // Predicated region
    $region38: #{tpu_custom_call.1} parent=1 // pred_check
      _
    $region39: #{tpu_custom_call.1} parent=1 // pred_check_branch
      %186 = sbr.rel (0) target = $region41
    $region40: #{tpu_custom_call.1} parent=1 // pred_region
      %s188 = ssub.s32 128, 128
      %189 = vsyncadd [#allocation5], %s188
      %s191 = sshll.u32 [#allocation11], 4
      %s192 = int_to_ptr.vmem [resolvable:$true] %s191
      %194 = dma.vmem_to_hbm [thread:$0]  %s192, 128, %s5, [#allocation5]
    $region41: #{tpu_custom_call.1} parent=1 // pred_fallthru
      _
    // Predicated region
    $region42: #{tpu_custom_call.1} parent=1 // pred_check
      _
    $region43: #{tpu_custom_call.1} parent=1 // pred_check_branch
      %196 = sbr.rel (0) target = $region45
    $region44: #{tpu_custom_call.1} parent=1 // pred_region
      %197 = dma.done [#allocation5], 128
    $region45: #{tpu_custom_call.1} parent=1 // pred_fallthru
      _
    %198 = vsyncpa [#allocation4], 1
    %199 = vsyncpa [#allocation5], 1
    %200 = vsyncpa [#allocation6], 1
    %201 = vsyncpa [#allocation9], 1

</llo_original>
